<compile_context>
chip_gen: v7x
topology: tpu7x:2x2x1
jax: 0.10.0
libtpu: 0.0.40
codegen_flags: <defaults>
</compile_context>

<pallas_src>
import jax
import jax.numpy as jnp
from jax.experimental import pallas as pl
from jax.experimental.pallas import tpu as pltpu

EMBEDDING_LENGTH = 50
WINDOW_SIZE = 5


def _round_up(x, m):
    return ((x + m - 1) // m) * m


def _mlp_kernel(idx_ref, w1f_ref, b1_ref, w2_ref, b2_ref, o_ref):
    # idx_ref : [TB, W]               int32  (batch tile of window indices)
    # w1f_ref : [W*V_pad, H_pad]      bf16   (embedding folded into fc1, padded)
    # b1_ref  : [1, H_pad]            f32
    # w2_ref  : [H_pad, OUT_pad]      bf16   (fc2^T padded)
    # b2_ref  : [1, OUT_pad]          f32    (padded lanes = -1e30 -> softmax mask)
    # o_ref   : [TB, OUT_pad]         bf16   (lane-dense output block)
    tb, win = idx_ref.shape
    kv, _ = w1f_ref.shape
    v_pad = kv // win

    idx = idx_ref[...]                                           # [TB, W] int32
    lane = jax.lax.broadcasted_iota(jnp.int32, (tb, v_pad), 1)   # [TB, V_pad]

    # Concatenated one-hot over all window slots -> single long-K MXU pass.
    onehots = [(lane == idx[:, w:w + 1]).astype(jnp.bfloat16) for w in range(win)]
    onehot = jnp.concatenate(onehots, axis=1)                    # [TB, W*V_pad] bf16

    # Fused (embedding -> fc1) matmul, f32 accumulate.
    h = jnp.dot(onehot, w1f_ref[...],
                preferred_element_type=jnp.float32) + b1_ref[...]   # [TB, H_pad]

    # dropout: eval-mode identity
    t = jnp.tanh(h)                                              # f32 (EUP)

    logits = jnp.dot(t.astype(jnp.bfloat16), w2_ref[...],
                     preferred_element_type=jnp.float32) + b2_ref[...]  # [TB, OUT_pad]

    # Softmax over last axis; padded lanes hold -1e30 (from b2) -> exp -> 0.
    m = jnp.max(logits, axis=1, keepdims=True)
    e = jnp.exp(logits - m)
    denom = jnp.sum(e, axis=1, keepdims=True)
    o_ref[...] = (e * pl.reciprocal(denom, approx=True)).astype(o_ref.dtype)


def prepare_params(embed_w, fc1_w, fc1_b, fc2_w, fc2_b):
    """One-time prep: fold the embedding table into fc1, transpose to [in,out],
    zero-pad to 128 lanes, cast MXU operands to bf16, and bake the softmax
    padding mask into the padded fc2-bias lanes."""
    V, E = embed_w.shape
    H, IN = fc1_w.shape
    OUT = fc2_w.shape[0]
    assert IN == WINDOW_SIZE * E

    V_pad = _round_up(V, 128)
    H_pad = _round_up(H, 128)
    OUT_pad = _round_up(OUT, 128)

    # Fold: for slot w, fused[w] = emb (V,E) @ fc1_w[:, w*E:(w+1)*E].T (E,H)
    emb32 = embed_w.astype(jnp.float32)                                # [V, E]
    fc1t = fc1_w.T.reshape(WINDOW_SIZE, E, H).astype(jnp.float32)      # [W, E, H]
    fused = jnp.einsum("ve,weh->wvh", emb32, fc1t)                     # [W, V, H] f32

    w1f = jnp.zeros((WINDOW_SIZE, V_pad, H_pad), jnp.bfloat16)
    w1f = w1f.at[:, :V, :H].set(fused.astype(jnp.bfloat16))
    w1f = w1f.reshape(WINDOW_SIZE * V_pad, H_pad)                      # [W*V_pad, H_pad]

    b1_p = jnp.zeros((1, H_pad), jnp.float32).at[0, :H].set(fc1_b.astype(jnp.float32))

    w2_p = jnp.zeros((H_pad, OUT_pad), jnp.bfloat16)
    w2_p = w2_p.at[:H, :OUT].set(fc2_w.T.astype(jnp.bfloat16))

    # Padded output lanes get a huge negative bias so exp() zeroes them.
    b2_p = jnp.full((1, OUT_pad), -1e30, jnp.float32).at[0, :OUT].set(
        fc2_b.astype(jnp.float32))

    return dict(w1f=w1f, b1=b1_p, w2=w2_p, b2=b2_p, out_dim=OUT)


def mlp1_forward(indices, params, *, batch_tile=512):
    """indices: [B, WINDOW_SIZE] int; params from prepare_params()."""
    B, W = indices.shape
    assert W == WINDOW_SIZE
    w1f, b1, w2, b2 = params["w1f"], params["b1"], params["w2"], params["b2"]
    KV, H_pad = w1f.shape
    OUT_pad = w2.shape[1]

    # Batch tiling: big tiles amortize per-grid-step overhead and fill the
    # 256-wide MXU on v6e/v7x.  If one tile would cover the whole batch but it
    # can be split into >=2 tiles of >=8 rows, split it so the "parallel"
    # batch axis shards across v7x's 2 TensorCores.
    B8 = _round_up(B, 8)
    tb = min(batch_tile, B8)
    if B8 >= 16 and tb >= B8:
        tb = _round_up((B8 + 1) // 2, 8)
    B_pad = _round_up(B8, tb)

    idx = indices.astype(jnp.int32)
    if B_pad != B:
        idx = jnp.zeros((B_pad, W), jnp.int32).at[:B].set(idx)

    grid = (B_pad // tb,)

    # Advisory cost estimate so XLA schedules sensibly around the custom call.
    flops = 2 * B_pad * (KV * H_pad + H_pad * OUT_pad)
    transcendentals = B_pad * (H_pad + OUT_pad)          # tanh + exp
    bytes_accessed = (idx.size * 4 + w1f.size * 2 + b1.size * 4
                      + w2.size * 2 + b2.size * 4 + B_pad * OUT_pad * 2)

    out = pl.pallas_call(
        _mlp_kernel,
        out_shape=jax.ShapeDtypeStruct((B_pad, OUT_pad), jnp.bfloat16),
        grid_spec=pl.GridSpec(
            grid=grid,
            in_specs=[
                pl.BlockSpec((tb, W), lambda i: (i, 0)),              # indices (tiled)
                pl.BlockSpec((KV, H_pad), lambda i: (0, 0)),          # fused emb+fc1 (resident)
                pl.BlockSpec((1, H_pad), lambda i: (0, 0)),           # b1
                pl.BlockSpec((H_pad, OUT_pad), lambda i: (0, 0)),     # fc2 (resident)
                pl.BlockSpec((1, OUT_pad), lambda i: (0, 0)),         # b2 (+ softmax mask)
            ],
            out_specs=pl.BlockSpec((tb, OUT_pad), lambda i: (i, 0)),
        ),
        compiler_params=pltpu.CompilerParams(
            dimension_semantics=("parallel",),   # independent batch tiles -> 2 TCs on v7x
        ),
        cost_estimate=pl.CostEstimate(
            flops=flops,
            transcendentals=transcendentals,
            bytes_accessed=bytes_accessed,
        ),
    )(idx, w1f, b1, w2, b2)

    # Slice off padded rows/lanes and return f32 probabilities (module returns f32).
    return out[:B, :params["out_dim"]].astype(jnp.float32)


if __name__ == "__main__":
    # Small deterministic setup consistent with the module:
    #   vocab=100, window=5, embedding=50 -> input_size=250
    #   hidden_size=32, output_size=8 labels, batch=8
    vocab_size = 100
    input_size = EMBEDDING_LENGTH * WINDOW_SIZE   # 250
    hidden_size = 32
    output_size = 8
    batch = 8

    key = jax.random.PRNGKey(0)
    k_emb, k_w1, k_b1, k_w2, k_b2, k_idx = jax.random.split(key, 6)

    embed_w = jax.random.normal(k_emb, (vocab_size, EMBEDDING_LENGTH), jnp.float32) * 0.1
    fc1_w = jax.random.normal(k_w1, (hidden_size, input_size), jnp.float32) * 0.05
    fc1_b = jax.random.normal(k_b1, (hidden_size,), jnp.float32) * 0.05
    fc2_w = jax.random.normal(k_w2, (output_size, hidden_size), jnp.float32) * 0.05
    fc2_b = jax.random.normal(k_b2, (output_size,), jnp.float32) * 0.05

    indices = jax.random.randint(k_idx, (batch, WINDOW_SIZE), 0, vocab_size, jnp.int32)

    params = prepare_params(embed_w, fc1_w, fc1_b, fc2_w, fc2_b)
    out = mlp1_forward(indices, params)
    out = jax.block_until_ready(out)

    # Reference in plain f32 JAX (eval-mode dropout = identity).
    x_ref = jnp.take(embed_w, indices, axis=0).reshape(batch, input_size)
    h_ref = jnp.tanh(x_ref @ fc1_w.T + fc1_b)
    logits_ref = h_ref @ fc2_w.T + fc2_b
    ref = jax.nn.softmax(logits_ref, axis=1)

    assert out.shape == (batch, output_size)
    # Tolerance accounts for bf16 MXU operands, bf16 output store, and the
    # approximate reciprocal in the softmax normalization.
    assert jnp.allclose(out, ref, atol=1e-2, rtol=5e-2), "mismatch vs reference"
    assert jnp.allclose(jnp.sum(out, axis=1), 1.0, atol=2e-2), "rows must sum to ~1"

    print("KERNEL_OK")
</pallas_src>

<mosaic_0001>
module attributes {stable_mosaic.version = 11 : i64} {
  func.func @_mlp_kernel(%arg0: i32, %arg1: memref<8x5xi32, #tpu.memory_space<vmem>>, %arg2: memref<640x128xbf16, #tpu.memory_space<vmem>>, %arg3: memref<1x128xf32, #tpu.memory_space<vmem>>, %arg4: memref<128x128xbf16, #tpu.memory_space<vmem>>, %arg5: memref<1x128xf32, #tpu.memory_space<vmem>>, %arg6: memref<8x128xbf16, #tpu.memory_space<vmem>>) attributes {dimension_semantics = [#tpu.dimension_semantics<parallel>], iteration_bounds = array<i64: 1>, scalar_prefetch = 0 : i64, scratch_operands = 0 : i64, tpu.core_type = #tpu.core_type<tc>, window_params = [{transform_indices = @transform_0, window_bounds = array<i64: 8, 5>}, {pipeline_mode = #tpu.pipeline_mode<synchronous>, transform_indices = @transform_1, window_bounds = array<i64: 640, 128>}, {pipeline_mode = #tpu.pipeline_mode<synchronous>, transform_indices = @transform_2, window_bounds = array<i64: 1, 128>}, {pipeline_mode = #tpu.pipeline_mode<synchronous>, transform_indices = @transform_3, window_bounds = array<i64: 128, 128>}, {pipeline_mode = #tpu.pipeline_mode<synchronous>, transform_indices = @transform_4, window_bounds = array<i64: 1, 128>}, {transform_indices = @transform_5, window_bounds = array<i64: 8, 128>}]} {
    %c0 = arith.constant 0 : index
    %c0_0 = arith.constant 0 : index
    %0 = vector.load %arg1[%c0, %c0_0] : memref<8x5xi32, #tpu.memory_space<vmem>>, vector<8x5xi32>
    %1 = tpu.iota {dimensions = array<i32: 1>} : vector<8x128xi32>
    %2 = vector.extract_strided_slice %0 {offsets = [0, 0], sizes = [8, 1], strides = [1, 1]} : vector<8x5xi32> to vector<8x1xi32>
    %3 = vector.broadcast %2 : vector<8x1xi32> to vector<8x128xi32>
    %4 = arith.cmpi eq, %1, %3 : vector<8x128xi32>
    %5 = arith.extui %4 : vector<8x128xi1> to vector<8x128xi32>
    %6 = arith.sitofp %5 : vector<8x128xi32> to vector<8x128xf32>
    %7 = arith.truncf %6 : vector<8x128xf32> to vector<8x128xbf16>
    %8 = vector.extract_strided_slice %0 {offsets = [0, 1], sizes = [8, 1], strides = [1, 1]} : vector<8x5xi32> to vector<8x1xi32>
    %9 = vector.broadcast %8 : vector<8x1xi32> to vector<8x128xi32>
    %10 = arith.cmpi eq, %1, %9 : vector<8x128xi32>
    %11 = arith.extui %10 : vector<8x128xi1> to vector<8x128xi32>
    %12 = arith.sitofp %11 : vector<8x128xi32> to vector<8x128xf32>
    %13 = arith.truncf %12 : vector<8x128xf32> to vector<8x128xbf16>
    %14 = vector.extract_strided_slice %0 {offsets = [0, 2], sizes = [8, 1], strides = [1, 1]} : vector<8x5xi32> to vector<8x1xi32>
    %15 = vector.broadcast %14 : vector<8x1xi32> to vector<8x128xi32>
    %16 = arith.cmpi eq, %1, %15 : vector<8x128xi32>
    %17 = arith.extui %16 : vector<8x128xi1> to vector<8x128xi32>
    %18 = arith.sitofp %17 : vector<8x128xi32> to vector<8x128xf32>
    %19 = arith.truncf %18 : vector<8x128xf32> to vector<8x128xbf16>
    %20 = vector.extract_strided_slice %0 {offsets = [0, 3], sizes = [8, 1], strides = [1, 1]} : vector<8x5xi32> to vector<8x1xi32>
    %21 = vector.broadcast %20 : vector<8x1xi32> to vector<8x128xi32>
    %22 = arith.cmpi eq, %1, %21 : vector<8x128xi32>
    %23 = arith.extui %22 : vector<8x128xi1> to vector<8x128xi32>
    %24 = arith.sitofp %23 : vector<8x128xi32> to vector<8x128xf32>
    %25 = arith.truncf %24 : vector<8x128xf32> to vector<8x128xbf16>
    %26 = vector.extract_strided_slice %0 {offsets = [0, 4], sizes = [8, 1], strides = [1, 1]} : vector<8x5xi32> to vector<8x1xi32>
    %27 = vector.broadcast %26 : vector<8x1xi32> to vector<8x128xi32>
    %28 = arith.cmpi eq, %1, %27 : vector<8x128xi32>
    %29 = arith.extui %28 : vector<8x128xi1> to vector<8x128xi32>
    %30 = arith.sitofp %29 : vector<8x128xi32> to vector<8x128xf32>
    %31 = arith.truncf %30 : vector<8x128xf32> to vector<8x128xbf16>
    %32 = tpu.concatenate %7, %13, %19, %25, %31 in 1 : vector<8x128xbf16>, vector<8x128xbf16>, vector<8x128xbf16>, vector<8x128xbf16>, vector<8x128xbf16> -> vector<8x640xbf16>
    %c0_1 = arith.constant 0 : index
    %c0_2 = arith.constant 0 : index
    %33 = vector.load %arg2[%c0_1, %c0_2] : memref<640x128xbf16, #tpu.memory_space<vmem>>, vector<640x128xbf16>
    %cst = arith.constant dense<0.000000e+00> : vector<8x128xf32>
    %34 = tpu.matmul %32, %33, %cst {dimension_numbers = #tpu.dot_dimension_numbers<[1], [0], [0], [1], [0, 0, 1, 1], [], []>} : vector<8x640xbf16>, vector<640x128xbf16>, vector<8x128xf32> -> vector<8x128xf32>
    %c0_3 = arith.constant 0 : index
    %c0_4 = arith.constant 0 : index
    %35 = vector.load %arg3[%c0_3, %c0_4] : memref<1x128xf32, #tpu.memory_space<vmem>>, vector<1x128xf32>
    %36 = vector.broadcast %35 : vector<1x128xf32> to vector<8x128xf32>
    %37 = arith.addf %34, %36 : vector<8x128xf32>
    %38 = math.tanh %37 : vector<8x128xf32>
    %39 = arith.truncf %38 : vector<8x128xf32> to vector<8x128xbf16>
    %c0_5 = arith.constant 0 : index
    %c0_6 = arith.constant 0 : index
    %40 = vector.load %arg4[%c0_5, %c0_6] : memref<128x128xbf16, #tpu.memory_space<vmem>>, vector<128x128xbf16>
    %cst_7 = arith.constant dense<0.000000e+00> : vector<8x128xf32>
    %41 = tpu.matmul %39, %40, %cst_7 {dimension_numbers = #tpu.dot_dimension_numbers<[1], [0], [0], [1], [0, 0, 1, 1], [], []>} : vector<8x128xbf16>, vector<128x128xbf16>, vector<8x128xf32> -> vector<8x128xf32>
    %c0_8 = arith.constant 0 : index
    %c0_9 = arith.constant 0 : index
    %42 = vector.load %arg5[%c0_8, %c0_9] : memref<1x128xf32, #tpu.memory_space<vmem>>, vector<1x128xf32>
    %43 = vector.broadcast %42 : vector<1x128xf32> to vector<8x128xf32>
    %44 = arith.addf %41, %43 : vector<8x128xf32>
    %cst_10 = arith.constant dense<0xFF800000> : vector<8xf32>
    %45 = vector.multi_reduction <maximumf>, %44, %cst_10 [1] : vector<8x128xf32> to vector<8xf32>
    %46 = vector.shape_cast %45 : vector<8xf32> to vector<8x1xf32>
    %47 = vector.broadcast %46 : vector<8x1xf32> to vector<8x128xf32>
    %48 = arith.subf %44, %47 : vector<8x128xf32>
    %49 = math.exp %48 : vector<8x128xf32>
    %cst_11 = arith.constant dense<0.000000e+00> : vector<8xf32>
    %50 = vector.multi_reduction <add>, %49, %cst_11 [1] : vector<8x128xf32> to vector<8xf32>
    %51 = vector.shape_cast %50 : vector<8xf32> to vector<8x1xf32>
    %52 = tpu.reciprocal %51 {approx = true} : vector<8x1xf32> -> vector<8x1xf32>
    %53 = vector.broadcast %52 : vector<8x1xf32> to vector<8x128xf32>
    %54 = arith.mulf %49, %53 : vector<8x128xf32>
    %55 = arith.truncf %54 : vector<8x128xf32> to vector<8x128xbf16>
    %c0_12 = arith.constant 0 : index
    %c0_13 = arith.constant 0 : index
    %56 = vector.load %arg6[%c0_12, %c0_13] : memref<8x128xbf16, #tpu.memory_space<vmem>>, vector<8x128xbf16>
    tpu.vector_store %arg6[%c0_12, %c0_13], %55 {strides = array<i32>} : memref<8x128xbf16, #tpu.memory_space<vmem>>, vector<8x128xbf16>,
    return
  }
  func.func @transform_0(%arg0: i32) -> (i32, i32) {
    %c0_i32 = arith.constant 0 : i32
    %c0_i32_0 = arith.constant 0 : i32
    return %arg0, %c0_i32 : i32, i32
  }
  func.func @transform_1(%arg0: i32) -> (i32, i32) {
    %c0_i32 = arith.constant 0 : i32
    %c0_i32_0 = arith.constant 0 : i32
    %c0_i32_1 = arith.constant 0 : i32
    return %c0_i32, %c0_i32_0 : i32, i32
  }
  func.func @transform_2(%arg0: i32) -> (i32, i32) {
    %c0_i32 = arith.constant 0 : i32
    %c0_i32_0 = arith.constant 0 : i32
    %c0_i32_1 = arith.constant 0 : i32
    return %c0_i32, %c0_i32_0 : i32, i32
  }
  func.func @transform_3(%arg0: i32) -> (i32, i32) {
    %c0_i32 = arith.constant 0 : i32
    %c0_i32_0 = arith.constant 0 : i32
    %c0_i32_1 = arith.constant 0 : i32
    return %c0_i32, %c0_i32_0 : i32, i32
  }
  func.func @transform_4(%arg0: i32) -> (i32, i32) {
    %c0_i32 = arith.constant 0 : i32
    %c0_i32_0 = arith.constant 0 : i32
    %c0_i32_1 = arith.constant 0 : i32
    return %c0_i32, %c0_i32_0 : i32, i32
  }
  func.func @transform_5(%arg0: i32) -> (i32, i32) {
    %c0_i32 = arith.constant 0 : i32
    %c0_i32_0 = arith.constant 0 : i32
    return %arg0, %c0_i32 : i32, i32
  }
}

</mosaic_0001>

<llo_original>
// kernel: tpu_custom_call.1
$region0: #{tpu_custom_call.1}
  #allocation0 [shape = 'u32[]', space=smem, size = 0x4, offset = 0x4, fixed_abs, tag = 'smem constant byte address 0x4 - core index']
  #allocation1 [shape = 'u32[144,128]{1,0:T(1,128)}', space=vmem, size = 0x12000, scoped, tag = 'internal scratch']
  %s0 = inlined_call_operand.hbm [shape: s32[8,5], index: 0, kind: input, shape index: {}]
  %s1 = inlined_call_operand.hbm [shape: bf16[640,128], index: 1, kind: input, shape index: {}]
  %s2 = inlined_call_operand.vmem [shape: f32[1,128], index: 2, kind: input, shape index: {}]
  %s3 = inlined_call_operand.hbm [shape: bf16[128,128], index: 3, kind: input, shape index: {}]
  %s4 = inlined_call_operand.vmem [shape: f32[1,128], index: 4, kind: input, shape index: {}]
  %s5 = inlined_call_operand.hbm [shape: bf16[8,128], index: 5, kind: output, shape index: {}]
  %s6 = sld [smem:[#allocation0]]
  $region42: #{tpu_custom_call.1} parent=0
    _
  %s8 = ssub.s32 1, %s6
  %s9 = scalar_select 0, %s8, %s6
  $region1: #{tpu_custom_call.1} parent=0
    #allocation2 [shape = 'u8[4096]{0}', space=vmem, size = 0x1000, scoped, tag = 'input window, operand 0, single buffered']
    #allocation3 [shape = 's32[1]{0}', space=sflag, size = 0x4, scoped, tag = 'scoped memory for tpu_custom_call.1']
    #allocation4 [shape = 's32[1]{0}', space=sflag, size = 0x4, scoped, tag = 'scoped memory for tpu_custom_call.1']
    #allocation5 [shape = 'u8[163840]{0}', space=vmem, size = 0x28000, scoped, tag = 'input window, operand 1, single buffered']
    #allocation6 [shape = 's32[1]{0}', space=sflag, size = 0x4, scoped, tag = 'scoped memory for tpu_custom_call.1']
    #allocation7 [shape = 'u8[32768]{0}', space=vmem, size = 0x8000, scoped, tag = 'input window, operand 3, single buffered']
    #allocation8 [shape = 'u8[2048]{0}', space=vmem, size = 0x800, scoped, tag = 'output window, operand 0, single buffered']
    %10 = vsyncpa [#allocation3], 0
    %11 = vsyncpa [#allocation6], 0
    %12 = vsyncpa [#allocation4], 0
    // Predicated region
    $region2: #{tpu_custom_call.1} parent=1 // pred_check
      _
    $region3: #{tpu_custom_call.1} parent=1 // pred_check_branch
      %14 = sbr.rel (0) target = $region5
    $region4: #{tpu_custom_call.1} parent=1 // pred_region
      %s16 = ssub.s32 128, 128
      %17 = vsyncadd [#allocation3], %s16
      %s19 = sshll.u32 [#allocation2], 4
      %s20 = int_to_ptr.vmem [resolvable:$true] %s19
      %22 = dma.hbm_to_vmem [thread:$0]  %s0, 128, %s20, [#allocation3]
    $region5: #{tpu_custom_call.1} parent=1 // pred_fallthru
      _
    // Predicated region
    $region6: #{tpu_custom_call.1} parent=1 // pred_check
      _
    $region7: #{tpu_custom_call.1} parent=1 // pred_check_branch
      %24 = sbr.rel (0) target = $region9
    $region8: #{tpu_custom_call.1} parent=1 // pred_region
      %s26 = ssub.s32 5120, 5120
      %27 = vsyncadd [#allocation6], %s26
      %s28 = sshll.u32 [#allocation5], 4
      %s29 = int_to_ptr.vmem [resolvable:$true] %s28
      %34 = dma.hbm_to_vmem [thread:$0]  %s1, 5120, %s29, [#allocation6], 64, 64, 4
    $region9: #{tpu_custom_call.1} parent=1 // pred_fallthru
      _
    // Predicated region
    $region10: #{tpu_custom_call.1} parent=1 // pred_check
      _
    $region11: #{tpu_custom_call.1} parent=1 // pred_check_branch
      %36 = sbr.rel (0) target = $region13
    $region12: #{tpu_custom_call.1} parent=1 // pred_region
      _
    $region13: #{tpu_custom_call.1} parent=1 // pred_fallthru
      _
    // Predicated region
    $region14: #{tpu_custom_call.1} parent=1 // pred_check
      _
    $region15: #{tpu_custom_call.1} parent=1 // pred_check_branch
      %38 = sbr.rel (0) target = $region17
    $region16: #{tpu_custom_call.1} parent=1 // pred_region
      %s40 = ssub.s32 1024, 1024
      %41 = vsyncadd [#allocation6], %s40
      %s42 = sshll.u32 [#allocation7], 4
      %s43 = int_to_ptr.vmem [resolvable:$true] %s42
      %48 = dma.hbm_to_vmem [thread:$0]  %s3, 1024, %s43, [#allocation6], 64, 64, 4
    $region17: #{tpu_custom_call.1} parent=1 // pred_fallthru
      _
    // Predicated region
    $region18: #{tpu_custom_call.1} parent=1 // pred_check
      _
    $region19: #{tpu_custom_call.1} parent=1 // pred_check_branch
      %50 = sbr.rel (0) target = $region21
    $region20: #{tpu_custom_call.1} parent=1 // pred_region
      _
    $region21: #{tpu_custom_call.1} parent=1 // pred_fallthru
      _
    // Predicated region
    $region22: #{tpu_custom_call.1} parent=1 // pred_check
      _
    $region23: #{tpu_custom_call.1} parent=1 // pred_check_branch
      %52 = sbr.rel (0) target = $region25
    $region24: #{tpu_custom_call.1} parent=1 // pred_region
      %53 = dma.done [#allocation3], 128
    $region25: #{tpu_custom_call.1} parent=1 // pred_fallthru
      _
    // Predicated region
    $region26: #{tpu_custom_call.1} parent=1 // pred_check
      _
    $region27: #{tpu_custom_call.1} parent=1 // pred_check_branch
      %55 = sbr.rel (0) target = $region29
    $region28: #{tpu_custom_call.1} parent=1 // pred_region
      %56 = dma.done [#allocation6], 5120
    $region29: #{tpu_custom_call.1} parent=1 // pred_fallthru
      _
    // Predicated region
    $region30: #{tpu_custom_call.1} parent=1 // pred_check
      _
    $region31: #{tpu_custom_call.1} parent=1 // pred_check_branch
      %58 = sbr.rel (0) target = $region33
    $region32: #{tpu_custom_call.1} parent=1 // pred_region
      %59 = dma.done [#allocation6], 1024
    $region33: #{tpu_custom_call.1} parent=1 // pred_fallthru
      _
    %v61 = vld [vmem:[#allocation2] sm:$0xff]
    %v62 = vlaneseq
    %v63 = vand.u32 %v62, 127
    %64 = vset.pattern.permute.xlu0 0
    %65 = vperm.xlu0 %64, %v61
    %v66 = vpop.permute.xlu0 %65
    %vm67 = vcmp.eq.s32.totalorder %v63, %v66
    %v68 = vsel %vm67, 1, 0
    %v69 = vcvt.s32.f32 %v68
    %v70 = vpack.c.bf16 %v69, %v69
    %71 = vset.pattern.permute.xlu0 1
    %72 = vperm.xlu0 %71, %v61
    %v73 = vpop.permute.xlu0 %72
    %vm74 = vcmp.eq.s32.totalorder %v63, %v73
    %v75 = vsel %vm74, 1, 0
    %v76 = vcvt.s32.f32 %v75
    %v77 = vpack.c.bf16 %v76, %v76
    %78 = vset.pattern.permute.xlu0 2
    %79 = vperm.xlu0 %78, %v61
    %v80 = vpop.permute.xlu0 %79
    %vm81 = vcmp.eq.s32.totalorder %v63, %v80
    %v82 = vsel %vm81, 1, 0
    %v83 = vcvt.s32.f32 %v82
    %v84 = vpack.c.bf16 %v83, %v83
    %85 = vset.pattern.permute.xlu0 3
    %86 = vperm.xlu0 %85, %v61
    %v87 = vpop.permute.xlu0 %86
    %vm88 = vcmp.eq.s32.totalorder %v63, %v87
    %v89 = vsel %vm88, 1, 0
    %v90 = vcvt.s32.f32 %v89
    %v91 = vpack.c.bf16 %v90, %v90
    %92 = vset.pattern.permute.xlu0 4
    %93 = vperm.xlu0 %92, %v61
    %v94 = vpop.permute.xlu0 %93
    %vm95 = vcmp.eq.s32.totalorder %v63, %v94
    %v96 = vsel %vm95, 1, 0
    %v97 = vcvt.s32.f32 %v96
    %v98 = vpack.c.bf16 %v97, %v97
    %v99 = vld [vmem:[#allocation5] sm:$0xf]
    %v100 = vld [vmem:[#allocation5 + $0x4] sm:$0xf]
    %v101 = vld [vmem:[#allocation5 + $0x8] sm:$0xf]
    %v102 = vld [vmem:[#allocation5 + $0xc] sm:$0xf]
    %v103 = vld [vmem:[#allocation5 + $0x10] sm:$0xf]
    %v104 = vld [vmem:[#allocation5 + $0x14] sm:$0xf]
    %v105 = vld [vmem:[#allocation5 + $0x18] sm:$0xf]
    %v106 = vld [vmem:[#allocation5 + $0x1c] sm:$0xf]
    %v107 = vld [vmem:[#allocation5 + $0x20] sm:$0xf]
    %v108 = vld [vmem:[#allocation5 + $0x24] sm:$0xf]
    %v109 = vld [vmem:[#allocation5 + $0x28] sm:$0xf]
    %v110 = vld [vmem:[#allocation5 + $0x2c] sm:$0xf]
    %v111 = vld [vmem:[#allocation5 + $0x30] sm:$0xf]
    %v112 = vld [vmem:[#allocation5 + $0x34] sm:$0xf]
    %v113 = vld [vmem:[#allocation5 + $0x38] sm:$0xf]
    %v114 = vld [vmem:[#allocation5 + $0x3c] sm:$0xf]
    %v115 = vld [vmem:[#allocation5 + $0x40] sm:$0xf]
    %v116 = vld [vmem:[#allocation5 + $0x44] sm:$0xf]
    %v117 = vld [vmem:[#allocation5 + $0x48] sm:$0xf]
    %v118 = vld [vmem:[#allocation5 + $0x4c] sm:$0xf]
    %v119 = vld [vmem:[#allocation5 + $0x50] sm:$0xf]
    %v120 = vld [vmem:[#allocation5 + $0x54] sm:$0xf]
    %v121 = vld [vmem:[#allocation5 + $0x58] sm:$0xf]
    %v122 = vld [vmem:[#allocation5 + $0x5c] sm:$0xf]
    %v123 = vld [vmem:[#allocation5 + $0x60] sm:$0xf]
    %v124 = vld [vmem:[#allocation5 + $0x64] sm:$0xf]
    %v125 = vld [vmem:[#allocation5 + $0x68] sm:$0xf]
    %v126 = vld [vmem:[#allocation5 + $0x6c] sm:$0xf]
    %v127 = vld [vmem:[#allocation5 + $0x70] sm:$0xf]
    %v128 = vld [vmem:[#allocation5 + $0x74] sm:$0xf]
    %v129 = vld [vmem:[#allocation5 + $0x78] sm:$0xf]
    %v130 = vld [vmem:[#allocation5 + $0x7c] sm:$0xf]
    %v131 = vld [vmem:[#allocation5 + $0x80] sm:$0xf]
    %v132 = vld [vmem:[#allocation5 + $0x84] sm:$0xf]
    %v133 = vld [vmem:[#allocation5 + $0x88] sm:$0xf]
    %v134 = vld [vmem:[#allocation5 + $0x8c] sm:$0xf]
    %v135 = vld [vmem:[#allocation5 + $0x90] sm:$0xf]
    %v136 = vld [vmem:[#allocation5 + $0x94] sm:$0xf]
    %v137 = vld [vmem:[#allocation5 + $0x98] sm:$0xf]
    %v138 = vld [vmem:[#allocation5 + $0x9c] sm:$0xf]
    %v139 = vld [vmem:[#allocation5 + $0xa0] sm:$0xf]
    %v140 = vld [vmem:[#allocation5 + $0xa4] sm:$0xf]
    %v141 = vld [vmem:[#allocation5 + $0xa8] sm:$0xf]
    %v142 = vld [vmem:[#allocation5 + $0xac] sm:$0xf]
    %v143 = vld [vmem:[#allocation5 + $0xb0] sm:$0xf]
    %v144 = vld [vmem:[#allocation5 + $0xb4] sm:$0xf]
    %v145 = vld [vmem:[#allocation5 + $0xb8] sm:$0xf]
    %v146 = vld [vmem:[#allocation5 + $0xbc] sm:$0xf]
    %v147 = vld [vmem:[#allocation5 + $0xc0] sm:$0xf]
    %v148 = vld [vmem:[#allocation5 + $0xc4] sm:$0xf]
    %v149 = vld [vmem:[#allocation5 + $0xc8] sm:$0xf]
    %v150 = vld [vmem:[#allocation5 + $0xcc] sm:$0xf]
    %v151 = vld [vmem:[#allocation5 + $0xd0] sm:$0xf]
    %v152 = vld [vmem:[#allocation5 + $0xd4] sm:$0xf]
    %v153 = vld [vmem:[#allocation5 + $0xd8] sm:$0xf]
    %v154 = vld [vmem:[#allocation5 + $0xdc] sm:$0xf]
    %v155 = vld [vmem:[#allocation5 + $0xe0] sm:$0xf]
    %v156 = vld [vmem:[#allocation5 + $0xe4] sm:$0xf]
    %v157 = vld [vmem:[#allocation5 + $0xe8] sm:$0xf]
    %v158 = vld [vmem:[#allocation5 + $0xec] sm:$0xf]
    %v159 = vld [vmem:[#allocation5 + $0xf0] sm:$0xf]
    %v160 = vld [vmem:[#allocation5 + $0xf4] sm:$0xf]
    %v161 = vld [vmem:[#allocation5 + $0xf8] sm:$0xf]
    %v162 = vld [vmem:[#allocation5 + $0xfc] sm:$0xf]
    %v163 = vld [vmem:[#allocation5 + $0x100] sm:$0xf]
    %v164 = vld [vmem:[#allocation5 + $0x104] sm:$0xf]
    %v165 = vld [vmem:[#allocation5 + $0x108] sm:$0xf]
    %v166 = vld [vmem:[#allocation5 + $0x10c] sm:$0xf]
    %v167 = vld [vmem:[#allocation5 + $0x110] sm:$0xf]
    %v168 = vld [vmem:[#allocation5 + $0x114] sm:$0xf]
    %v169 = vld [vmem:[#allocation5 + $0x118] sm:$0xf]
    %v170 = vld [vmem:[#allocation5 + $0x11c] sm:$0xf]
    %v171 = vld [vmem:[#allocation5 + $0x120] sm:$0xf]
    %v172 = vld [vmem:[#allocation5 + $0x124] sm:$0xf]
    %v173 = vld [vmem:[#allocation5 + $0x128] sm:$0xf]
    %v174 = vld [vmem:[#allocation5 + $0x12c] sm:$0xf]
    %v175 = vld [vmem:[#allocation5 + $0x130] sm:$0xf]
    %v176 = vld [vmem:[#allocation5 + $0x134] sm:$0xf]
    %v177 = vld [vmem:[#allocation5 + $0x138] sm:$0xf]
    %v178 = vld [vmem:[#allocation5 + $0x13c] sm:$0xf]
    %v179 = vld [vmem:[%s2] sm:$0x1]
    %v181 = vlaneseq
    %v182 = vshrl.u32 %v181, 7
    %v183 = vsub.s32 0, %v182
    %v184 = vrot.slane %v179, %v183
    %v266 = vunpack.c.l.b16 %v99
    %v267 = vunpack.c.l.b16 %v100
    %v268 = vunpack.c.l.b16 %v101
    %v269 = vunpack.c.l.b16 %v102
    %v270 = vunpack.c.l.b16 %v103
    %v271 = vunpack.c.l.b16 %v104
    %v272 = vunpack.c.l.b16 %v105
    %v273 = vunpack.c.l.b16 %v106
    %v274 = vunpack.c.l.b16 %v107
    %v275 = vunpack.c.l.b16 %v108
    %v276 = vunpack.c.l.b16 %v109
    %v277 = vunpack.c.l.b16 %v110
    %v278 = vunpack.c.l.b16 %v111
    %v279 = vunpack.c.l.b16 %v112
    %v280 = vunpack.c.l.b16 %v113
    %v281 = vunpack.c.l.b16 %v114
    %v282 = vunpack.c.l.b16 %v115
    %v283 = vunpack.c.l.b16 %v116
    %v284 = vunpack.c.l.b16 %v117
    %v285 = vunpack.c.l.b16 %v118
    %v286 = vunpack.c.l.b16 %v119
    %v287 = vunpack.c.l.b16 %v120
    %v288 = vunpack.c.l.b16 %v121
    %v289 = vunpack.c.l.b16 %v122
    %v290 = vunpack.c.l.b16 %v123
    %v291 = vunpack.c.l.b16 %v124
    %v292 = vunpack.c.l.b16 %v125
    %v293 = vunpack.c.l.b16 %v126
    %v294 = vunpack.c.l.b16 %v127
    %v295 = vunpack.c.l.b16 %v128
    %v296 = vunpack.c.l.b16 %v129
    %v297 = vunpack.c.l.b16 %v130
    %v298 = vunpack.c.l.b16 %v131
    %v299 = vunpack.c.l.b16 %v132
    %v300 = vunpack.c.l.b16 %v133
    %v301 = vunpack.c.l.b16 %v134
    %v302 = vunpack.c.l.b16 %v135
    %v303 = vunpack.c.l.b16 %v136
    %v304 = vunpack.c.l.b16 %v137
    %v305 = vunpack.c.l.b16 %v138
    %v306 = vunpack.c.l.b16 %v139
    %v307 = vunpack.c.l.b16 %v140
    %v308 = vunpack.c.l.b16 %v141
    %v309 = vunpack.c.l.b16 %v142
    %v310 = vunpack.c.l.b16 %v143
    %v311 = vunpack.c.l.b16 %v144
    %v312 = vunpack.c.l.b16 %v145
    %v313 = vunpack.c.l.b16 %v146
    %v314 = vunpack.c.l.b16 %v147
    %v315 = vunpack.c.l.b16 %v148
    %v316 = vunpack.c.l.b16 %v149
    %v317 = vunpack.c.l.b16 %v150
    %v318 = vunpack.c.l.b16 %v151
    %v319 = vunpack.c.l.b16 %v152
    %v320 = vunpack.c.l.b16 %v153
    %v321 = vunpack.c.l.b16 %v154
    %v322 = vunpack.c.l.b16 %v155
    %v323 = vunpack.c.l.b16 %v156
    %v324 = vunpack.c.l.b16 %v157
    %v325 = vunpack.c.l.b16 %v158
    %v326 = vunpack.c.l.b16 %v159
    %v327 = vunpack.c.l.b16 %v160
    %v328 = vunpack.c.l.b16 %v161
    %v329 = vunpack.c.l.b16 %v162
    %v330 = vunpack.c.l.b16 %v163
    %v331 = vunpack.c.l.b16 %v164
    %v332 = vunpack.c.l.b16 %v165
    %v333 = vunpack.c.l.b16 %v166
    %v334 = vunpack.c.l.b16 %v167
    %v335 = vunpack.c.l.b16 %v168
    %v336 = vunpack.c.l.b16 %v169
    %v337 = vunpack.c.l.b16 %v170
    %v338 = vunpack.c.l.b16 %v171
    %v339 = vunpack.c.l.b16 %v172
    %v340 = vunpack.c.l.b16 %v173
    %v341 = vunpack.c.l.b16 %v174
    %v342 = vunpack.c.l.b16 %v175
    %v343 = vunpack.c.l.b16 %v176
    %v344 = vunpack.c.l.b16 %v177
    %v345 = vunpack.c.l.b16 %v178
    %v346 = vpack.c.b16 %v267, %v266
    %v347 = vpack.c.b16 %v269, %v268
    %v348 = vpack.c.b16 %v271, %v270
    %v349 = vpack.c.b16 %v273, %v272
    %v350 = vpack.c.b16 %v275, %v274
    %v351 = vpack.c.b16 %v277, %v276
    %v352 = vpack.c.b16 %v279, %v278
    %v353 = vpack.c.b16 %v281, %v280
    %v354 = vpack.c.b16 %v283, %v282
    %v355 = vpack.c.b16 %v285, %v284
    %v356 = vpack.c.b16 %v287, %v286
    %v357 = vpack.c.b16 %v289, %v288
    %v358 = vpack.c.b16 %v291, %v290
    %v359 = vpack.c.b16 %v293, %v292
    %v360 = vpack.c.b16 %v295, %v294
    %v361 = vpack.c.b16 %v297, %v296
    %v362 = vpack.c.b16 %v299, %v298
    %v363 = vpack.c.b16 %v301, %v300
    %v364 = vpack.c.b16 %v303, %v302
    %v365 = vpack.c.b16 %v305, %v304
    %v366 = vpack.c.b16 %v307, %v306
    %v367 = vpack.c.b16 %v309, %v308
    %v368 = vpack.c.b16 %v311, %v310
    %v369 = vpack.c.b16 %v313, %v312
    %v370 = vpack.c.b16 %v315, %v314
    %v371 = vpack.c.b16 %v317, %v316
    %v372 = vpack.c.b16 %v319, %v318
    %v373 = vpack.c.b16 %v321, %v320
    %v374 = vpack.c.b16 %v323, %v322
    %v375 = vpack.c.b16 %v325, %v324
    %v376 = vpack.c.b16 %v327, %v326
    %v377 = vpack.c.b16 %v329, %v328
    %v378 = vpack.c.b16 %v331, %v330
    %v379 = vpack.c.b16 %v333, %v332
    %v380 = vpack.c.b16 %v335, %v334
    %v381 = vpack.c.b16 %v337, %v336
    %v382 = vpack.c.b16 %v339, %v338
    %v383 = vpack.c.b16 %v341, %v340
    %v384 = vpack.c.b16 %v343, %v342
    %v385 = vpack.c.b16 %v345, %v344
    %426 = vmatprep.subr.bf16.mxu0 0
    %427 = vmatpush1.bf16.msra.mxu0 %v346
    %428 = vmatprep.subr.bf16.mxu0 0
    %429 = vmatpush1.bf16.msra.mxu0 %v347
    %430 = vmatprep.subr.bf16.mxu0 0
    %431 = vmatpush1.bf16.msra.mxu0 %v348
    %432 = vmatprep.subr.bf16.mxu0 0
    %433 = vmatpush1.bf16.msra.mxu0 %v349
    %434 = vmatprep.subr.bf16.mxu0 0
    %435 = vmatpush1.bf16.msra.mxu0 %v350
    %436 = vmatprep.subr.bf16.mxu0 0
    %437 = vmatpush1.bf16.msra.mxu0 %v351
    %438 = vmatprep.subr.bf16.mxu0 0
    %439 = vmatpush1.bf16.msra.mxu0 %v352
    %440 = vmatprep.subr.bf16.mxu0 0
    %441 = vmatpush1.bf16.msra.mxu0 %v353
    %442 = vmatprep.subr.bf16.mxu0 0
    %443 = vmatpush1.bf16.msra.mxu0 %v354
    %444 = vmatprep.subr.bf16.mxu0 0
    %445 = vmatpush1.bf16.msra.mxu0 %v355
    %446 = vmatprep.subr.bf16.mxu0 0
    %447 = vmatpush1.bf16.msra.mxu0 %v356
    %448 = vmatprep.subr.bf16.mxu0 0
    %449 = vmatpush1.bf16.msra.mxu0 %v357
    %450 = vmatprep.subr.bf16.mxu0 0
    %451 = vmatpush1.bf16.msra.mxu0 %v358
    %452 = vmatprep.subr.bf16.mxu0 0
    %453 = vmatpush1.bf16.msra.mxu0 %v359
    %454 = vmatprep.subr.bf16.mxu0 0
    %455 = vmatpush1.bf16.msra.mxu0 %v360
    %456 = vmatprep.subr.bf16.mxu0 0
    %457 = vmatpush1.bf16.msra.mxu0 %v361
    %458 = vmatprep.mubr.bf16.mxu0 %v77
    %459 = vmatmul.mubr.bf16.gmra.mrb[0].mxu0 %v70
    %v460 = vpop.f32.mrb[0].mxu0
    %v461 = vadd.f32 %v184, %v460
    %v462 = vpop.f32.mrb[0].mxu0
    %v463 = vpop.f32.mrb[0].mxu0
    %v464 = vpop.f32.mrb[0].mxu0
    %465 = vdwg.mxu0
    %466 = vmatprep.subr.bf16.mxu0 0
    %467 = vmatpush1.bf16.msra.mxu0 %v362
    %468 = vmatprep.subr.bf16.mxu0 0
    %469 = vmatpush1.bf16.msra.mxu0 %v363
    %470 = vmatprep.subr.bf16.mxu0 0
    %471 = vmatpush1.bf16.msra.mxu0 %v364
    %472 = vmatprep.subr.bf16.mxu0 0
    %473 = vmatpush1.bf16.msra.mxu0 %v365
    %474 = vmatprep.subr.bf16.mxu0 0
    %475 = vmatpush1.bf16.msra.mxu0 %v366
    %476 = vmatprep.subr.bf16.mxu0 0
    %477 = vmatpush1.bf16.msra.mxu0 %v367
    %478 = vmatprep.subr.bf16.mxu0 0
    %479 = vmatpush1.bf16.msra.mxu0 %v368
    %480 = vmatprep.subr.bf16.mxu0 0
    %481 = vmatpush1.bf16.msra.mxu0 %v369
    %482 = vmatprep.subr.bf16.mxu0 0
    %483 = vmatpush1.bf16.msra.mxu0 %v370
    %484 = vmatprep.subr.bf16.mxu0 0
    %485 = vmatpush1.bf16.msra.mxu0 %v371
    %486 = vmatprep.subr.bf16.mxu0 0
    %487 = vmatpush1.bf16.msra.mxu0 %v372
    %488 = vmatprep.subr.bf16.mxu0 0
    %489 = vmatpush1.bf16.msra.mxu0 %v373
    %490 = vmatprep.subr.bf16.mxu0 0
    %491 = vmatpush1.bf16.msra.mxu0 %v374
    %492 = vmatprep.subr.bf16.mxu0 0
    %493 = vmatpush1.bf16.msra.mxu0 %v375
    %494 = vmatprep.subr.bf16.mxu0 0
    %495 = vmatpush1.bf16.msra.mxu0 %v376
    %496 = vmatprep.subr.bf16.mxu0 0
    %497 = vmatpush1.bf16.msra.mxu0 %v377
    %498 = vmatprep.mubr.bf16.mxu0 %v91
    %499 = vmatmul.mubr.bf16.gmra.mrb[0].mxu0 %v84
    %v500 = vpop.f32.mrb[0].mxu0
    %v501 = vadd.f32 %v461, %v500
    %v502 = vpop.f32.mrb[0].mxu0
    %v503 = vpop.f32.mrb[0].mxu0
    %v504 = vpop.f32.mrb[0].mxu0
    %505 = vdwg.mxu0
    %506 = vmatprep.subr.bf16.mxu0 0
    %507 = vmatpush1.bf16.msra.mxu0 %v378
    %508 = vmatprep.subr.bf16.mxu0 0
    %509 = vmatpush1.bf16.msra.mxu0 %v379
    %510 = vmatprep.subr.bf16.mxu0 0
    %511 = vmatpush1.bf16.msra.mxu0 %v380
    %512 = vmatprep.subr.bf16.mxu0 0
    %513 = vmatpush1.bf16.msra.mxu0 %v381
    %514 = vmatprep.subr.bf16.mxu0 0
    %515 = vmatpush1.bf16.msra.mxu0 %v382
    %516 = vmatprep.subr.bf16.mxu0 0
    %517 = vmatpush1.bf16.msra.mxu0 %v383
    %518 = vmatprep.subr.bf16.mxu0 0
    %519 = vmatpush1.bf16.msra.mxu0 %v384
    %520 = vmatprep.subr.bf16.mxu0 0
    %521 = vmatpush1.bf16.msra.mxu0 %v385
    %522 = vmatprep.subr.bf16.mxu0 0
    %523 = vmatpush1.bf16.msra.mxu0 0
    %524 = vmatprep.subr.bf16.mxu0 0
    %525 = vmatpush1.bf16.msra.mxu0 0
    %526 = vmatprep.subr.bf16.mxu0 0
    %527 = vmatpush1.bf16.msra.mxu0 0
    %528 = vmatprep.subr.bf16.mxu0 0
    %529 = vmatpush1.bf16.msra.mxu0 0
    %530 = vmatprep.subr.bf16.mxu0 0
    %531 = vmatpush1.bf16.msra.mxu0 0
    %532 = vmatprep.subr.bf16.mxu0 0
    %533 = vmatpush1.bf16.msra.mxu0 0
    %534 = vmatprep.subr.bf16.mxu0 0
    %535 = vmatpush1.bf16.msra.mxu0 0
    %536 = vmatprep.subr.bf16.mxu0 0
    %537 = vmatpush1.bf16.msra.mxu0 0
    %538 = vmatprep.mubr.bf16.mxu0 0
    %539 = vmatmul.mubr.bf16.gmra.mrb[0].mxu0 %v98
    %v540 = vpop.f32.mrb[0].mxu0
    %v541 = vadd.f32 %v501, %v540
    %v542 = vpop.f32.mrb[0].mxu0
    %v543 = vpop.f32.mrb[0].mxu0
    %v544 = vpop.f32.mrb[0].mxu0
    %545 = vdwg.mxu0
    %v546 = vtanh.pop %v541
    %v547 = vpack.c.bf16 %v546, %v546
    %v548 = vld [vmem:[#allocation7] sm:$0xf]
    %v549 = vld [vmem:[#allocation7 + $0x4] sm:$0xf]
    %v550 = vld [vmem:[#allocation7 + $0x8] sm:$0xf]
    %v551 = vld [vmem:[#allocation7 + $0xc] sm:$0xf]
    %v552 = vld [vmem:[#allocation7 + $0x10] sm:$0xf]
    %v553 = vld [vmem:[#allocation7 + $0x14] sm:$0xf]
    %v554 = vld [vmem:[#allocation7 + $0x18] sm:$0xf]
    %v555 = vld [vmem:[#allocation7 + $0x1c] sm:$0xf]
    %v556 = vld [vmem:[#allocation7 + $0x20] sm:$0xf]
    %v557 = vld [vmem:[#allocation7 + $0x24] sm:$0xf]
    %v558 = vld [vmem:[#allocation7 + $0x28] sm:$0xf]
    %v559 = vld [vmem:[#allocation7 + $0x2c] sm:$0xf]
    %v560 = vld [vmem:[#allocation7 + $0x30] sm:$0xf]
    %v561 = vld [vmem:[#allocation7 + $0x34] sm:$0xf]
    %v562 = vld [vmem:[#allocation7 + $0x38] sm:$0xf]
    %v563 = vld [vmem:[#allocation7 + $0x3c] sm:$0xf]
    %v564 = vld [vmem:[%s4] sm:$0x1]
    %v566 = vlaneseq
    %v567 = vshrl.u32 %v566, 7
    %v568 = vsub.s32 0, %v567
    %v569 = vrot.slane %v564, %v568
    %v587 = vunpack.c.l.b16 %v548
    %v588 = vunpack.c.l.b16 %v549
    %v589 = vunpack.c.l.b16 %v550
    %v590 = vunpack.c.l.b16 %v551
    %v591 = vunpack.c.l.b16 %v552
    %v592 = vunpack.c.l.b16 %v553
    %v593 = vunpack.c.l.b16 %v554
    %v594 = vunpack.c.l.b16 %v555
    %v595 = vunpack.c.l.b16 %v556
    %v596 = vunpack.c.l.b16 %v557
    %v597 = vunpack.c.l.b16 %v558
    %v598 = vunpack.c.l.b16 %v559
    %v599 = vunpack.c.l.b16 %v560
    %v600 = vunpack.c.l.b16 %v561
    %v601 = vunpack.c.l.b16 %v562
    %v602 = vunpack.c.l.b16 %v563
    %v603 = vpack.c.b16 %v588, %v587
    %v604 = vpack.c.b16 %v590, %v589
    %v605 = vpack.c.b16 %v592, %v591
    %v606 = vpack.c.b16 %v594, %v593
    %v607 = vpack.c.b16 %v596, %v595
    %v608 = vpack.c.b16 %v598, %v597
    %v609 = vpack.c.b16 %v600, %v599
    %v610 = vpack.c.b16 %v602, %v601
    %619 = vmatprep.subr.bf16.mxu0 0
    %620 = vmatpush1.bf16.msra.mxu0 %v603
    %621 = vmatprep.subr.bf16.mxu0 0
    %622 = vmatpush1.bf16.msra.mxu0 %v604
    %623 = vmatprep.subr.bf16.mxu0 0
    %624 = vmatpush1.bf16.msra.mxu0 %v605
    %625 = vmatprep.subr.bf16.mxu0 0
    %626 = vmatpush1.bf16.msra.mxu0 %v606
    %627 = vmatprep.subr.bf16.mxu0 0
    %628 = vmatpush1.bf16.msra.mxu0 %v607
    %629 = vmatprep.subr.bf16.mxu0 0
    %630 = vmatpush1.bf16.msra.mxu0 %v608
    %631 = vmatprep.subr.bf16.mxu0 0
    %632 = vmatpush1.bf16.msra.mxu0 %v609
    %633 = vmatprep.subr.bf16.mxu0 0
    %634 = vmatpush1.bf16.msra.mxu0 %v610
    %635 = vmatprep.subr.bf16.mxu0 0
    %636 = vmatpush1.bf16.msra.mxu0 0
    %637 = vmatprep.subr.bf16.mxu0 0
    %638 = vmatpush1.bf16.msra.mxu0 0
    %639 = vmatprep.subr.bf16.mxu0 0
    %640 = vmatpush1.bf16.msra.mxu0 0
    %641 = vmatprep.subr.bf16.mxu0 0
    %642 = vmatpush1.bf16.msra.mxu0 0
    %643 = vmatprep.subr.bf16.mxu0 0
    %644 = vmatpush1.bf16.msra.mxu0 0
    %645 = vmatprep.subr.bf16.mxu0 0
    %646 = vmatpush1.bf16.msra.mxu0 0
    %647 = vmatprep.subr.bf16.mxu0 0
    %648 = vmatpush1.bf16.msra.mxu0 0
    %649 = vmatprep.subr.bf16.mxu0 0
    %650 = vmatpush1.bf16.msra.mxu0 0
    %651 = vmatprep.mubr.bf16.mxu0 0
    %652 = vmatmul.mubr.bf16.gmra.mrb[0].mxu0 %v547
    %v653 = vpop.f32.mrb[0].mxu0
    %v654 = vadd.f32 %v569, %v653
    %v655 = vpop.f32.mrb[0].mxu0
    %v656 = vpop.f32.mrb[0].mxu0
    %v657 = vpop.f32.mrb[0].mxu0
    %658 = vdwg.mxu0
    %659 = vmax.xlane.f32.xlu0 %v654
    %v660 = vpop.xlane.xlu0 %659
    %v661 = vsub.f32 %v654, %v660
    %v662 = vmul.f32 %v661, 1.442695
    %v663 = vpow.pop %v662
    %664 = vadd.xlane.f32.xlu0 %v663
    %v665 = vpop.xlane.xlu0 %664
    %v666 = vrcp.pop %v665
    %v667 = vmul.f32 %v663, %v666
    %v668 = vpack.c.bf16 %v667, %v667
    %669 = vst [vmem:[#allocation8] sm:$0xf] %v668
    // Predicated region
    $region34: #{tpu_custom_call.1} parent=1 // pred_check
      _
    $region35: #{tpu_custom_call.1} parent=1 // pred_check_branch
      %671 = sbr.rel (0) target = $region37
    $region36: #{tpu_custom_call.1} parent=1 // pred_region
      %s673 = ssub.s32 64, 64
      %674 = vsyncadd [#allocation4], %s673
      %s676 = sshll.u32 [#allocation8], 4
      %s677 = int_to_ptr.vmem [resolvable:$true] %s676
      %679 = dma.vmem_to_hbm [thread:$0]  %s677, 64, %s5, [#allocation4]
    $region37: #{tpu_custom_call.1} parent=1 // pred_fallthru
      _
    // Predicated region
    $region38: #{tpu_custom_call.1} parent=1 // pred_check
      _
    $region39: #{tpu_custom_call.1} parent=1 // pred_check_branch
      %681 = sbr.rel (0) target = $region41
    $region40: #{tpu_custom_call.1} parent=1 // pred_region
      %682 = dma.done [#allocation4], 64
    $region41: #{tpu_custom_call.1} parent=1 // pred_fallthru
      _
    %683 = vsyncpa [#allocation3], 1
    %684 = vsyncpa [#allocation6], 1
    %685 = vsyncpa [#allocation4], 1

</llo_original>
